<compile_context>
chip_gen: v7x
topology: tpu7x:2x2x1
jax: 0.10.0
libtpu: 0.0.40
codegen_flags: <defaults>
</compile_context>

<pallas_src>
import jax
import jax.numpy as jnp
from jax.experimental import pallas as pl
from jax.experimental.pallas import tpu as pltpu

_LANE = 128
_W_TILE_DB_BUDGET = 16 << 20       # W double-buffer VMEM budget (bytes)
_INTER_RESIDENT_BUDGET = 8 << 20   # budget for keeping interactions VMEM-resident
_SMALL_PROBLEM_BYTES = 12 << 20    # below this -> single-block kernel (no grid)


def _round_up(x, m):
    return ((x + m - 1) // m) * m


def _pick_tile(total, preferred, align=_LANE):
    """Largest tile <= preferred that divides `total` and is a multiple of `align`;
    falls back to the full extent (a full-extent block dim is always legal)."""
    if total <= preferred:
        return total
    t = (preferred // align) * align
    while t >= align:
        if total % t == 0:
            return t
        t -= align
    return total


# ----------------------------- kernels ------------------------------------ #

def _fip_single_block_kernel(inter_ref, w_ref, b_ref, s_ref, o_ref):
    acc = jnp.dot(inter_ref[...], w_ref[...].astype(jnp.float32),
                  preferred_element_type=jnp.float32)
    o_ref[...] = (acc * s_ref[...] + b_ref[...]).astype(o_ref.dtype)


def _make_tiled_kernel(tk, inter_resident):
    """Tiled weight-streaming kernel.

    inter_ref: [B, PP] (resident) or [B, tk] (streamed) f32 interactions
    w_ref:     [tk, tl] weight tile (f32 / bf16 / int8 / fp8), dequantized on VPU
    b_ref:     [1, tl] bias tile, s_ref: [1, tl] per-column weight scale
    o_ref:     [B, tl] f32 output block, resident across the reduction axis
    """
    def _kernel(inter_ref, w_ref, b_ref, s_ref, o_ref):
        k = pl.program_id(1)

        @pl.when(k == 0)
        def _init():
            o_ref[...] = jnp.zeros_like(o_ref)

        if inter_resident:
            start = pl.multiple_of(k * tk, _LANE)
            inter = inter_ref[:, pl.ds(start, tk)]
        else:
            inter = inter_ref[...]

        # LHS stays f32; only W carries quantization error (bf16/int8/fp8 paths).
        o_ref[...] += jnp.dot(inter, w_ref[...].astype(jnp.float32),
                              preferred_element_type=jnp.float32)

        @pl.when(k == pl.num_programs(1) - 1)
        def _finalize():
            o_ref[...] = o_ref[...] * s_ref[...] + b_ref[...]

    return _kernel


# ----------------------------- wrapper ------------------------------------ #

def fully_interacted_linear_pert_predictor(pert_embedding, weights, bias, *,
                                           weight_scale=None, tk=None, tl=None,
                                           inter_resident=None):
    """pert_embedding: [B, P] f32; weights: [P*P, L] (f32/bf16/int8/fp8);
    bias: [L]; weight_scale: optional [L] per-column dequant scale. Returns [B, L] f32."""
    B, P = pert_embedding.shape
    PP, L = weights.shape
    assert PP == P * P, "weights first dim must be pert_embedding_dim ** 2"

    x = pert_embedding.astype(jnp.float32)
    # Flattened outer product, i-major: inter[b, i*P + j] = x[b,i]*x[b,j].
    # TODO(synk): training-mode stochastic dropout (pltpu.prng_*) intentionally not
    # applied; eval-mode dropout is the identity.
    inter = (x[:, :, None] * x[:, None, :]).reshape(B, PP)

    bias2d = bias.reshape(1, L).astype(jnp.float32)
    if weight_scale is None:
        scale2d = jnp.ones((1, L), jnp.float32)
    else:
        scale2d = weight_scale.reshape(1, L).astype(jnp.float32)

    w_bytes = weights.dtype.itemsize
    forced_tiles = (tk is not None) or (tl is not None)

    # ---- tiny-problem bypass: one VMEM block, no grid / pipeline overhead ----
    total_bytes = B * PP * 4 + PP * L * w_bytes + B * L * 4 + 2 * L * 4
    if not forced_tiles and total_bytes <= _SMALL_PROBLEM_BYTES:
        cost = pl.CostEstimate(flops=int(2 * B * PP * L + 2 * B * L),
                               transcendentals=0,
                               bytes_accessed=int(total_bytes))
        return pl.pallas_call(
            _fip_single_block_kernel,
            out_shape=jax.ShapeDtypeStruct((B, L), jnp.float32),
            in_specs=[pl.BlockSpec(memory_space=pltpu.MemorySpace.VMEM)] * 4,
            out_specs=pl.BlockSpec(memory_space=pltpu.MemorySpace.VMEM),
            cost_estimate=cost,
        )(inter, weights, bias2d, scale2d)

    # ---- tiled, weight-streaming path ----
    w_in = weights
    PP_eff, L_eff = PP, L
    auto_tk, auto_tl = tk is None, tl is None

    if auto_tk:
        t = _pick_tile(PP_eff, 2048)
        if t == PP_eff and PP_eff > 2048:
            # No lane-aligned divisor: zero-pad the reduction dim (padded cols add 0).
            PP_eff = _round_up(PP, _LANE)
            inter = jnp.pad(inter, ((0, 0), (0, PP_eff - PP)))
            w_in = jnp.pad(w_in, ((0, PP_eff - PP), (0, 0)))
            t = _pick_tile(PP_eff, 2048)
        tk = t
    if auto_tl:
        t = _pick_tile(L_eff, 1024)
        if t == L_eff and L_eff > 1024:
            L_eff = _round_up(L, _LANE)
            w_in = jnp.pad(w_in, ((0, 0), (0, L_eff - L)))
            bias2d = jnp.pad(bias2d, ((0, 0), (0, L_eff - L)))
            scale2d = jnp.pad(scale2d, ((0, 0), (0, L_eff - L)))
            t = _pick_tile(L_eff, 1024)
        # Keep both v7x TensorCores busy: >= 2 tiles on the parallel (L) axis.
        if L_eff // t < 2 and L_eff >= 2 * _LANE:
            t_alt = _pick_tile(L_eff, max(_LANE, (L_eff // 2 // _LANE) * _LANE))
            if t_alt < L_eff:
                t = t_alt
        tl = t
    if auto_tk:
        # Keep the W double buffer within budget (re-derived for v7x's 64 MiB VMEM).
        while 2 * tk * tl * w_bytes > _W_TILE_DB_BUDGET and tk > _LANE:
            new_tk = _pick_tile(PP_eff, max(_LANE, tk // 2))
            if new_tk >= tk:
                break
            tk = new_tk

    assert PP_eff % tk == 0 and L_eff % tl == 0, (PP_eff, tk, L_eff, tl)

    if inter_resident is None:
        inter_resident = (2 * B * PP_eff * 4) <= _INTER_RESIDENT_BUDGET

    grid = (L_eff // tl, PP_eff // tk)        # reduction axis last

    if inter_resident:
        # Constant block index -> DMA'd once, stays VMEM-resident; sliced in-kernel.
        inter_spec = pl.BlockSpec((B, PP_eff), lambda j, k: (0, 0))
        inter_stream_factor = 1
    else:
        inter_spec = pl.BlockSpec((B, tk), lambda j, k: (0, k))
        inter_stream_factor = grid[0]

    cost = pl.CostEstimate(
        flops=int(2 * B * PP_eff * L_eff + 2 * B * L_eff),
        transcendentals=0,
        bytes_accessed=int(PP_eff * L_eff * w_bytes
                           + B * PP_eff * 4 * inter_stream_factor
                           + B * L_eff * 4 + 2 * L_eff * 4),
    )

    vmem_needed = (2 * tk * tl * w_bytes
                   + (2 * B * PP_eff * 4 if inter_resident else 2 * B * tk * 4)
                   + 2 * B * tl * 4 + 4 * tl * 4)
    vmem_limit = int(min(max(vmem_needed + (16 << 20), 32 << 20), 128 << 20))

    out = pl.pallas_call(
        _make_tiled_kernel(tk, inter_resident),
        out_shape=jax.ShapeDtypeStruct((B, L_eff), jnp.float32),
        grid_spec=pltpu.PrefetchScalarGridSpec(
            num_scalar_prefetch=0,
            grid=grid,
            in_specs=[
                inter_spec,                                   # interactions
                pl.BlockSpec((tk, tl), lambda j, k: (k, j)),  # W tile (streamed)
                pl.BlockSpec((1, tl), lambda j, k: (0, j)),   # bias (per L tile)
                pl.BlockSpec((1, tl), lambda j, k: (0, j)),   # per-column W scale
            ],
            out_specs=pl.BlockSpec((B, tl), lambda j, k: (0, j)),
        ),
        compiler_params=pltpu.CompilerParams(
            dimension_semantics=("parallel", "arbitrary"),
            vmem_limit_bytes=vmem_limit,
        ),
        cost_estimate=cost,
    )(inter, w_in, bias2d, scale2d)

    return out[:, :L] if L_eff != L else out


def reference_forward(pert_embedding, weights, bias):
    """Pure-JAX reference matching the PyTorch forward (eval mode)."""
    B = pert_embedding.shape[0]
    inter = jnp.einsum("bi,bj->bij", pert_embedding, pert_embedding)
    inter = inter.reshape(B, -1)
    return jnp.dot(inter, weights.astype(jnp.float32),
                   precision=jax.lax.Precision.HIGHEST) + bias


if __name__ == "__main__":
    key = jax.random.PRNGKey(0)
    k1, k2, k3, k4, k5, k6, k7 = jax.random.split(key, 7)

    # --- Test 1: module-default small shapes -> single-block bypass path ---
    B, P, L = 8, 16, 128
    x = jax.random.normal(k1, (B, P), dtype=jnp.float32)
    w = jax.random.normal(k2, (P * P, L), dtype=jnp.float32)
    b = jnp.zeros((L,), dtype=jnp.float32)
    out = jax.block_until_ready(fully_interacted_linear_pert_predictor(x, w, b))
    ref = reference_forward(x, w, b)
    assert out.shape == (B, L)
    assert jnp.allclose(out, ref, atol=1e-4, rtol=1e-4), "small-path f32 mismatch"

    # --- Test 2: forced small tiles -> tiled path, VMEM-resident interactions ---
    B2, P2, L2 = 8, 32, 256
    x2 = jax.random.normal(k3, (B2, P2), dtype=jnp.float32)
    w2 = jax.random.normal(k4, (P2 * P2, L2), dtype=jnp.float32)
    b2 = jax.random.normal(k5, (L2,), dtype=jnp.float32) * 0.1
    ref2 = reference_forward(x2, w2, b2)
    out2 = jax.block_until_ready(
        fully_interacted_linear_pert_predictor(x2, w2, b2, tk=256, tl=128))
    assert jnp.allclose(out2, ref2, atol=1e-3, rtol=1e-3), "tiled resident mismatch"

    # --- Test 3: tiled path with streamed (non-resident) interactions ---
    out3 = jax.block_until_ready(
        fully_interacted_linear_pert_predictor(x2, w2, b2, tk=256, tl=128,
                                               inter_resident=False))
    assert jnp.allclose(out3, ref2, atol=1e-3, rtol=1e-3), "tiled streamed mismatch"

    # --- Test 4: bf16 weight streaming, f32 LHS + f32 accumulation ---
    out4 = jax.block_until_ready(
        fully_interacted_linear_pert_predictor(x2, w2.astype(jnp.bfloat16), b2,
                                               tk=256, tl=128))
    assert jnp.allclose(out4, ref2, atol=2e-1, rtol=2e-2), "bf16-weight mismatch"

    # --- Test 5: int8 weights + per-column scale (dequant epilogue) ---
    w_scale = (jnp.max(jnp.abs(w2), axis=0) / 127.0).astype(jnp.float32)
    w_q = jnp.round(w2 / w_scale).astype(jnp.int8)
    ref5 = reference_forward(x2, w_q.astype(jnp.float32) * w_scale, b2)
    out5 = jax.block_until_ready(
        fully_interacted_linear_pert_predictor(x2, w_q, b2, weight_scale=w_scale,
                                               tk=256, tl=128))
    assert jnp.allclose(out5, ref5, atol=1e-2, rtol=1e-3), "int8-weight mismatch"

    # --- Test 6: auto-tiled path (big enough to skip the single-block bypass) ---
    B6, P6, L6 = 8, 64, 1024
    x6 = jax.random.normal(k6, (B6, P6), dtype=jnp.float32)
    w6 = jax.random.normal(k7, (P6 * P6, L6), dtype=jnp.float32)
    b6 = jnp.zeros((L6,), dtype=jnp.float32)
    out6 = jax.block_until_ready(fully_interacted_linear_pert_predictor(x6, w6, b6))
    ref6 = reference_forward(x6, w6, b6)
    assert jnp.allclose(out6, ref6, atol=2e-3, rtol=2e-3), "auto-tiled mismatch"

    print("KERNEL_OK")
</pallas_src>

<mosaic_0001>
module attributes {stable_mosaic.version = 11 : i64} {
  func.func @_fip_single_block_kernel(%arg0: memref<8x256xf32, #tpu.memory_space<vmem>>, %arg1: memref<256x128xf32, #tpu.memory_space<vmem>>, %arg2: memref<1x128xf32, #tpu.memory_space<vmem>>, %arg3: memref<1x128xf32, #tpu.memory_space<vmem>>, %arg4: memref<8x128xf32, #tpu.memory_space<vmem>>) attributes {dimension_semantics = [], scalar_prefetch = 0 : i64, scratch_operands = 0 : i64, tpu.core_type = #tpu.core_type<tc>} {
    %c0 = arith.constant 0 : index
    %c0_0 = arith.constant 0 : index
    %0 = vector.load %arg0[%c0, %c0_0] : memref<8x256xf32, #tpu.memory_space<vmem>>, vector<8x256xf32>
    %c0_1 = arith.constant 0 : index
    %c0_2 = arith.constant 0 : index
    %1 = vector.load %arg1[%c0_1, %c0_2] : memref<256x128xf32, #tpu.memory_space<vmem>>, vector<256x128xf32>
    %cst = arith.constant dense<0.000000e+00> : vector<8x128xf32>
    %2 = tpu.matmul %0, %1, %cst {dimension_numbers = #tpu.dot_dimension_numbers<[1], [0], [0], [1], [0, 0, 1, 1], [], []>} : vector<8x256xf32>, vector<256x128xf32>, vector<8x128xf32> -> vector<8x128xf32>
    %c0_3 = arith.constant 0 : index
    %c0_4 = arith.constant 0 : index
    %3 = vector.load %arg3[%c0_3, %c0_4] : memref<1x128xf32, #tpu.memory_space<vmem>>, vector<1x128xf32>
    %4 = vector.broadcast %3 : vector<1x128xf32> to vector<8x128xf32>
    %5 = arith.mulf %2, %4 : vector<8x128xf32>
    %c0_5 = arith.constant 0 : index
    %c0_6 = arith.constant 0 : index
    %6 = vector.load %arg2[%c0_5, %c0_6] : memref<1x128xf32, #tpu.memory_space<vmem>>, vector<1x128xf32>
    %7 = vector.broadcast %6 : vector<1x128xf32> to vector<8x128xf32>
    %8 = arith.addf %5, %7 : vector<8x128xf32>
    %c0_7 = arith.constant 0 : index
    %c0_8 = arith.constant 0 : index
    %9 = vector.load %arg4[%c0_7, %c0_8] : memref<8x128xf32, #tpu.memory_space<vmem>>, vector<8x128xf32>
    tpu.vector_store %arg4[%c0_7, %c0_8], %8 {strides = array<i32>} : memref<8x128xf32, #tpu.memory_space<vmem>>, vector<8x128xf32>,
    return
  }
}

</mosaic_0001>

<llo_original>
// kernel: tpu_custom_call.1
$region0: #{tpu_custom_call.1}
  #allocation0 [shape = 'u32[]', space=smem, size = 0x4, offset = 0x4, fixed_abs, tag = 'smem constant byte address 0x4 - core index']
  #allocation1 [shape = 'u32[144,128]{1,0:T(1,128)}', space=vmem, size = 0x12000, scoped, tag = 'internal scratch']
  %s0 = inlined_call_operand.hbm [shape: f32[8,256], index: 0, kind: input, shape index: {}]
  %s1 = inlined_call_operand.hbm [shape: f32[256,128], index: 1, kind: input, shape index: {}]
  %s2 = inlined_call_operand.vmem [shape: f32[1,128], index: 2, kind: input, shape index: {}]
  %s3 = inlined_call_operand.vmem [shape: f32[1,128], index: 3, kind: input, shape index: {}]
  %s4 = inlined_call_operand.hbm [shape: f32[8,128], index: 4, kind: output, shape index: {}]
  %s5 = sld [smem:[#allocation0]]
  $region34: #{tpu_custom_call.1} parent=0
    _
  %s7 = ssub.s32 1, %s5
  %s8 = scalar_select 0, %s7, %s5
  $region1: #{tpu_custom_call.1} parent=0
    #allocation2 [shape = 'u8[8192]{0}', space=vmem, size = 0x2000, scoped, tag = 'input window, operand 0, single buffered']
    #allocation3 [shape = 's32[1]{0}', space=sflag, size = 0x4, scoped, tag = 'scoped memory for tpu_custom_call.1']
    #allocation4 [shape = 's32[1]{0}', space=sflag, size = 0x4, scoped, tag = 'scoped memory for tpu_custom_call.1']
    #allocation5 [shape = 'u8[131072]{0}', space=vmem, size = 0x20000, scoped, tag = 'input window, operand 1, single buffered']
    #allocation6 [shape = 's32[1]{0}', space=sflag, size = 0x4, scoped, tag = 'scoped memory for tpu_custom_call.1']
    #allocation7 [shape = 'u8[4096]{0}', space=vmem, size = 0x1000, scoped, tag = 'output window, operand 0, single buffered']
    %9 = vsyncpa [#allocation3], 0
    %10 = vsyncpa [#allocation6], 0
    %11 = vsyncpa [#allocation4], 0
    // Predicated region
    $region2: #{tpu_custom_call.1} parent=1 // pred_check
      _
    $region3: #{tpu_custom_call.1} parent=1 // pred_check_branch
      %13 = sbr.rel (0) target = $region5
    $region4: #{tpu_custom_call.1} parent=1 // pred_region
      %s15 = ssub.s32 256, 256
      %16 = vsyncadd [#allocation3], %s15
      %s18 = sshll.u32 [#allocation2], 4
      %s19 = int_to_ptr.vmem [resolvable:$true] %s18
      %21 = dma.hbm_to_vmem [thread:$0]  %s0, 256, %s19, [#allocation3]
    $region5: #{tpu_custom_call.1} parent=1 // pred_fallthru
      _
    // Predicated region
    $region6: #{tpu_custom_call.1} parent=1 // pred_check
      _
    $region7: #{tpu_custom_call.1} parent=1 // pred_check_branch
      %23 = sbr.rel (0) target = $region9
    $region8: #{tpu_custom_call.1} parent=1 // pred_region
      %s25 = ssub.s32 4096, 4096
      %26 = vsyncadd [#allocation6], %s25
      %s27 = sshll.u32 [#allocation5], 4
      %s28 = int_to_ptr.vmem [resolvable:$true] %s27
      %33 = dma.hbm_to_vmem [thread:$0]  %s1, 4096, %s28, [#allocation6], 128, 128, 8
    $region9: #{tpu_custom_call.1} parent=1 // pred_fallthru
      _
    // Predicated region
    $region10: #{tpu_custom_call.1} parent=1 // pred_check
      _
    $region11: #{tpu_custom_call.1} parent=1 // pred_check_branch
      %35 = sbr.rel (0) target = $region13
    $region12: #{tpu_custom_call.1} parent=1 // pred_region
      _
    $region13: #{tpu_custom_call.1} parent=1 // pred_fallthru
      _
    // Predicated region
    $region14: #{tpu_custom_call.1} parent=1 // pred_check
      _
    $region15: #{tpu_custom_call.1} parent=1 // pred_check_branch
      %37 = sbr.rel (0) target = $region17
    $region16: #{tpu_custom_call.1} parent=1 // pred_region
      _
    $region17: #{tpu_custom_call.1} parent=1 // pred_fallthru
      _
    // Predicated region
    $region18: #{tpu_custom_call.1} parent=1 // pred_check
      _
    $region19: #{tpu_custom_call.1} parent=1 // pred_check_branch
      %39 = sbr.rel (0) target = $region21
    $region20: #{tpu_custom_call.1} parent=1 // pred_region
      %40 = dma.done [#allocation3], 256
    $region21: #{tpu_custom_call.1} parent=1 // pred_fallthru
      _
    // Predicated region
    $region22: #{tpu_custom_call.1} parent=1 // pred_check
      _
    $region23: #{tpu_custom_call.1} parent=1 // pred_check_branch
      %42 = sbr.rel (0) target = $region25
    $region24: #{tpu_custom_call.1} parent=1 // pred_region
      %43 = dma.done [#allocation6], 4096
    $region25: #{tpu_custom_call.1} parent=1 // pred_fallthru
      _
    %v44 = vld [vmem:[#allocation2] sm:$0xff]
    %v45 = vld [vmem:[#allocation2 + $0x8] sm:$0xff]
    %v46 = vld [vmem:[#allocation5] sm:$0xff]
    %v47 = vld [vmem:[#allocation5 + $0x8] sm:$0xff]
    %v48 = vld [vmem:[#allocation5 + $0x10] sm:$0xff]
    %v49 = vld [vmem:[#allocation5 + $0x18] sm:$0xff]
    %v50 = vld [vmem:[#allocation5 + $0x20] sm:$0xff]
    %v51 = vld [vmem:[#allocation5 + $0x28] sm:$0xff]
    %v52 = vld [vmem:[#allocation5 + $0x30] sm:$0xff]
    %v53 = vld [vmem:[#allocation5 + $0x38] sm:$0xff]
    %v54 = vld [vmem:[#allocation5 + $0x40] sm:$0xff]
    %v55 = vld [vmem:[#allocation5 + $0x48] sm:$0xff]
    %v56 = vld [vmem:[#allocation5 + $0x50] sm:$0xff]
    %v57 = vld [vmem:[#allocation5 + $0x58] sm:$0xff]
    %v58 = vld [vmem:[#allocation5 + $0x60] sm:$0xff]
    %v59 = vld [vmem:[#allocation5 + $0x68] sm:$0xff]
    %v60 = vld [vmem:[#allocation5 + $0x70] sm:$0xff]
    %v61 = vld [vmem:[#allocation5 + $0x78] sm:$0xff]
    %v62 = vld [vmem:[#allocation5 + $0x80] sm:$0xff]
    %v63 = vld [vmem:[#allocation5 + $0x88] sm:$0xff]
    %v64 = vld [vmem:[#allocation5 + $0x90] sm:$0xff]
    %v65 = vld [vmem:[#allocation5 + $0x98] sm:$0xff]
    %v66 = vld [vmem:[#allocation5 + $0xa0] sm:$0xff]
    %v67 = vld [vmem:[#allocation5 + $0xa8] sm:$0xff]
    %v68 = vld [vmem:[#allocation5 + $0xb0] sm:$0xff]
    %v69 = vld [vmem:[#allocation5 + $0xb8] sm:$0xff]
    %v70 = vld [vmem:[#allocation5 + $0xc0] sm:$0xff]
    %v71 = vld [vmem:[#allocation5 + $0xc8] sm:$0xff]
    %v72 = vld [vmem:[#allocation5 + $0xd0] sm:$0xff]
    %v73 = vld [vmem:[#allocation5 + $0xd8] sm:$0xff]
    %v74 = vld [vmem:[#allocation5 + $0xe0] sm:$0xff]
    %v75 = vld [vmem:[#allocation5 + $0xe8] sm:$0xff]
    %v76 = vld [vmem:[#allocation5 + $0xf0] sm:$0xff]
    %v77 = vld [vmem:[#allocation5 + $0xf8] sm:$0xff]
    %78 = vmatprep.subr.mxu0 0.0
    %79 = vmatpush1.msra.mxu0 %v46
    %80 = vmatprep.subr.mxu0 0.0
    %81 = vmatpush1.msra.mxu0 %v47
    %82 = vmatprep.subr.mxu0 0.0
    %83 = vmatpush1.msra.mxu0 %v48
    %84 = vmatprep.subr.mxu0 0.0
    %85 = vmatpush1.msra.mxu0 %v49
    %86 = vmatprep.subr.mxu0 0.0
    %87 = vmatpush1.msra.mxu0 %v50
    %88 = vmatprep.subr.mxu0 0.0
    %89 = vmatpush1.msra.mxu0 %v51
    %90 = vmatprep.subr.mxu0 0.0
    %91 = vmatpush1.msra.mxu0 %v52
    %92 = vmatprep.subr.mxu0 0.0
    %93 = vmatpush1.msra.mxu0 %v53
    %94 = vmatprep.subr.mxu0 0.0
    %95 = vmatpush1.msra.mxu0 %v54
    %96 = vmatprep.subr.mxu0 0.0
    %97 = vmatpush1.msra.mxu0 %v55
    %98 = vmatprep.subr.mxu0 0.0
    %99 = vmatpush1.msra.mxu0 %v56
    %100 = vmatprep.subr.mxu0 0.0
    %101 = vmatpush1.msra.mxu0 %v57
    %102 = vmatprep.subr.mxu0 0.0
    %103 = vmatpush1.msra.mxu0 %v58
    %104 = vmatprep.subr.mxu0 0.0
    %105 = vmatpush1.msra.mxu0 %v59
    %106 = vmatprep.subr.mxu0 0.0
    %107 = vmatpush1.msra.mxu0 %v60
    %108 = vmatprep.subr.mxu0 0.0
    %109 = vmatpush1.msra.mxu0 %v61
    %110 = vmatprep.subr.mxu0 0.0
    %111 = vmatpush1.msra.mxu0 %v62
    %112 = vmatprep.subr.mxu0 0.0
    %113 = vmatpush1.msra.mxu0 %v63
    %114 = vmatprep.subr.mxu0 0.0
    %115 = vmatpush1.msra.mxu0 %v64
    %116 = vmatprep.subr.mxu0 0.0
    %117 = vmatpush1.msra.mxu0 %v65
    %118 = vmatprep.subr.mxu0 0.0
    %119 = vmatpush1.msra.mxu0 %v66
    %120 = vmatprep.subr.mxu0 0.0
    %121 = vmatpush1.msra.mxu0 %v67
    %122 = vmatprep.subr.mxu0 0.0
    %123 = vmatpush1.msra.mxu0 %v68
    %124 = vmatprep.subr.mxu0 0.0
    %125 = vmatpush1.msra.mxu0 %v69
    %126 = vmatprep.subr.mxu0 0.0
    %127 = vmatpush1.msra.mxu0 %v70
    %128 = vmatprep.subr.mxu0 0.0
    %129 = vmatpush1.msra.mxu0 %v71
    %130 = vmatprep.subr.mxu0 0.0
    %131 = vmatpush1.msra.mxu0 %v72
    %132 = vmatprep.subr.mxu0 0.0
    %133 = vmatpush1.msra.mxu0 %v73
    %134 = vmatprep.subr.mxu0 0.0
    %135 = vmatpush1.msra.mxu0 %v74
    %136 = vmatprep.subr.mxu0 0.0
    %137 = vmatpush1.msra.mxu0 %v75
    %138 = vmatprep.subr.mxu0 0.0
    %139 = vmatpush1.msra.mxu0 %v76
    %140 = vmatprep.subr.mxu0 0.0
    %141 = vmatpush1.msra.mxu0 %v77
    %142 = vmatprep.mubr.f32.mxu0 %v45
    %143 = vmatmul.mubr.f32.gmra.mrb[0].mxu0 %v44
    %v144 = vpop.f32.mrb[0].mxu0
    %v145 = vadd.f32 0.0, %v144
    %v146 = vpop.f32.mrb[0].mxu0
    %147 = vdwg.mxu0
    %v148 = vld [vmem:[%s3] sm:$0x1]
    %v150 = vlaneseq
    %v151 = vshrl.u32 %v150, 7
    %v152 = vsub.s32 0, %v151
    %v153 = vrot.slane %v148, %v152
    %v155 = vmul.f32 %v145, %v153
    %v156 = vld [vmem:[%s2] sm:$0x1]
    %v158 = vlaneseq
    %v159 = vshrl.u32 %v158, 7
    %v160 = vsub.s32 0, %v159
    %v161 = vrot.slane %v156, %v160
    %v163 = vadd.f32 %v155, %v161
    %164 = vst [vmem:[#allocation7] sm:$0xff] %v163
    // Predicated region
    $region26: #{tpu_custom_call.1} parent=1 // pred_check
      _
    $region27: #{tpu_custom_call.1} parent=1 // pred_check_branch
      %166 = sbr.rel (0) target = $region29
    $region28: #{tpu_custom_call.1} parent=1 // pred_region
      %s168 = ssub.s32 128, 128
      %169 = vsyncadd [#allocation4], %s168
      %s171 = sshll.u32 [#allocation7], 4
      %s172 = int_to_ptr.vmem [resolvable:$true] %s171
      %174 = dma.vmem_to_hbm [thread:$0]  %s172, 128, %s4, [#allocation4]
    $region29: #{tpu_custom_call.1} parent=1 // pred_fallthru
      _
    // Predicated region
    $region30: #{tpu_custom_call.1} parent=1 // pred_check
      _
    $region31: #{tpu_custom_call.1} parent=1 // pred_check_branch
      %176 = sbr.rel (0) target = $region33
    $region32: #{tpu_custom_call.1} parent=1 // pred_region
      %177 = dma.done [#allocation4], 128
    $region33: #{tpu_custom_call.1} parent=1 // pred_fallthru
      _
    %178 = vsyncpa [#allocation3], 1
    %179 = vsyncpa [#allocation6], 1
    %180 = vsyncpa [#allocation4], 1

</llo_original>
